<compile_context>
chip_gen: v7x
topology: tpu7x:2x2x1
jax: 0.10.0
libtpu: 0.0.40
codegen_flags: <defaults>
</compile_context>

<pallas_src>
import jax
import jax.numpy as jnp
from jax.experimental import pallas as pl
from jax.experimental.pallas import tpu as pltpu


def _fused_affine_kernel(bias_ref, s_ref, x_ref, o_ref):
    # bias_ref: SMEM (1,) f32 fused bias  (W2 @ b1 + b2)
    # s_ref:    VMEM (128, 32) f32 constant block-diagonal selection matrix
    # x_ref:    VMEM (tile_rows, 128) block of the free (B/32, 128) view of x
    # o_ref:    VMEM (tile_rows, 32) block; o[r, j] = result for batch 32*r + j
    x = x_ref[...].astype(jnp.float32)                       # torch `.float()`
    o_ref[...] = (
        jnp.dot(x, s_ref[...], preferred_element_type=jnp.float32) + bias_ref[0]
    )


def covid_classifier_forward(x, w1, b1, w2, b2, *, tile_rows=4096):
    """x: (B, 4). w1: (5, 4) torch layout, b1: (5,), w2: (1, 5), b2: (1,)."""
    B = x.shape[0]
    assert x.shape[1] == 4

    # --- exact algebraic fusion of the two Linear layers (no activation) ---
    w1f = jnp.asarray(w1, jnp.float32)          # (5, 4)
    b1f = jnp.asarray(b1, jnp.float32)          # (5,)
    w2f = jnp.asarray(w2, jnp.float32)          # (1, 5)
    b2f = jnp.asarray(b2, jnp.float32)          # (1,)
    w_eff = (w2f @ w1f)[0]                      # (4,)
    b_eff = w2f @ b1f + b2f                     # (1,)  -> SMEM

    # Constant (128, 32) block-diagonal matrix: lane l of a view-row belongs
    # to batch element j = l // 4 with feature i = l % 4.
    lane = jnp.arange(128)
    S = jnp.where(
        (lane[:, None] // 4) == jnp.arange(32)[None, :],
        w_eff[lane % 4][:, None],
        0.0,
    ).astype(jnp.float32)                       # (128, 32), 16 KB

    # --- free (B/32, 128) view of the contiguous (B, 4) input ---
    # Pad only to the layout quantum (32 batch rows = 1 view row) and to at
    # least 8 view rows (sublane alignment). For B % 32 == 0 and B >= 256 this
    # is a zero-copy reshape: no extra HBM pass over the input.
    pad_b = (-B) % 32
    if (B + pad_b) < 256:
        pad_b = 256 - B
    if pad_b:
        x = jnp.pad(x, ((0, pad_b), (0, 0)))
    rows = x.shape[0] // 32
    x_view = x.reshape(rows, 128)

    # --- tile selection: sublane-aligned, MB-scale blocks; keep >= 2 grid
    # steps when there is enough work so both v7x TensorCores are fed ---
    tile_rows = max(8, (int(tile_rows) // 8) * 8)
    if rows >= 16:
        tile_rows = min(tile_rows, ((rows + 1) // 2 + 7) // 8 * 8)
    tile_rows = min(tile_rows, (rows + 7) // 8 * 8)
    n_blocks = pl.cdiv(rows, tile_rows)

    cost = pl.CostEstimate(
        flops=8 * B,                                            # 4 mul + 4 add per row
        transcendentals=0,
        bytes_accessed=x.size * x.dtype.itemsize + 4 * B + S.size * 4,
    )

    out = pl.pallas_call(
        _fused_affine_kernel,
        out_shape=jax.ShapeDtypeStruct((rows, 32), jnp.float32),
        grid=(n_blocks,),
        in_specs=[
            pl.BlockSpec(memory_space=pltpu.MemorySpace.SMEM),    # b_eff (1,)
            pl.BlockSpec((128, 32), lambda i: (0, 0)),            # S, fetched once
            pl.BlockSpec((tile_rows, 128), lambda i: (i, 0)),     # x view block
        ],
        out_specs=pl.BlockSpec((tile_rows, 32), lambda i: (i, 0)),
        compiler_params=pltpu.CompilerParams(
            dimension_semantics=("parallel",),
            vmem_limit_bytes=32 * 1024 * 1024,
        ),
        cost_estimate=cost,
    )(b_eff, S, x_view)

    # (rows, 32) -> (rows*32, 1) is a free reshape; slice off padding rows.
    return out.reshape(-1, 1)[:B]


def init_params(key):
    """Deterministic parameter init mimicking torch.nn.Linear default
    (uniform in [-1/sqrt(fan_in), 1/sqrt(fan_in)])."""
    k1, k2, k3, k4 = jax.random.split(key, 4)
    bound1 = 1.0 / jnp.sqrt(4.0)
    bound2 = 1.0 / jnp.sqrt(5.0)
    w1 = jax.random.uniform(k1, (5, 4), jnp.float32, -bound1, bound1)  # torch (out,in)
    b1 = jax.random.uniform(k2, (5,), jnp.float32, -bound1, bound1)
    w2 = jax.random.uniform(k3, (1, 5), jnp.float32, -bound2, bound2)
    b2 = jax.random.uniform(k4, (1,), jnp.float32, -bound2, bound2)
    return w1, b1, w2, b2


if __name__ == "__main__":
    key = jax.random.PRNGKey(0)
    kx1, kx2, kp = jax.random.split(key, 3)
    w1, b1, w2, b2 = init_params(kp)

    # Unfused two-layer reference (same math as the torch module).
    ref_fn = lambda x: (x.astype(jnp.float32) @ w1.T + b1) @ w2.T + b2

    # Small demo batch (padded to the 256-row quantum, single grid step).
    B = 8
    x = jax.random.normal(kx1, (B, 4), jnp.float32)
    out = jax.block_until_ready(covid_classifier_forward(x, w1, b1, w2, b2))
    assert out.shape == (B, 1)
    assert jnp.allclose(out, ref_fn(x), atol=1e-5), "mismatch vs reference (B=8)"

    # Batch multiple of 32 (zero-copy reshape) with a small tile:
    # exercises multi-block grid + ragged last block.
    B2 = 800
    x2 = jax.random.normal(kx2, (B2, 4), jnp.float32)
    out2 = jax.block_until_ready(
        covid_classifier_forward(x2, w1, b1, w2, b2, tile_rows=16))
    assert out2.shape == (B2, 1)
    assert jnp.allclose(out2, ref_fn(x2), atol=1e-5), "mismatch vs reference (B=800)"

    print("KERNEL_OK")
</pallas_src>

<mosaic_0001>
module attributes {stable_mosaic.version = 11 : i64} {
  func.func @_fused_affine_kernel(%arg0: i32, %arg1: memref<1xf32, #tpu.memory_space<smem>>, %arg2: memref<128x32xf32, #tpu.memory_space<vmem>>, %arg3: memref<8x128xf32, #tpu.memory_space<vmem>>, %arg4: memref<8x32xf32, #tpu.memory_space<vmem>>) attributes {dimension_semantics = [#tpu.dimension_semantics<parallel>], iteration_bounds = array<i64: 1>, scalar_prefetch = 0 : i64, scratch_operands = 0 : i64, tpu.core_type = #tpu.core_type<tc>, window_params = [{transform_indices = @transform_0, window_bounds = array<i64: 1>}, {pipeline_mode = #tpu.pipeline_mode<synchronous>, transform_indices = @transform_1, window_bounds = array<i64: 128, 32>}, {transform_indices = @transform_2, window_bounds = array<i64: 8, 128>}, {transform_indices = @transform_3, window_bounds = array<i64: 8, 32>}]} {
    %c0 = arith.constant 0 : index
    %c0_0 = arith.constant 0 : index
    %0 = vector.load %arg3[%c0, %c0_0] : memref<8x128xf32, #tpu.memory_space<vmem>>, vector<8x128xf32>
    %c0_1 = arith.constant 0 : index
    %c0_2 = arith.constant 0 : index
    %1 = vector.load %arg2[%c0_1, %c0_2] : memref<128x32xf32, #tpu.memory_space<vmem>>, vector<128x32xf32>
    %cst = arith.constant dense<0.000000e+00> : vector<8x32xf32>
    %2 = tpu.matmul %0, %1, %cst {dimension_numbers = #tpu.dot_dimension_numbers<[1], [0], [0], [1], [0, 0, 1, 1], [], []>} : vector<8x128xf32>, vector<128x32xf32>, vector<8x32xf32> -> vector<8x32xf32>
    %c0_3 = arith.constant 0 : index
    %3 = memref.load %arg1[%c0_3] : memref<1xf32, #tpu.memory_space<smem>>
    %4 = vector.broadcast %3 : f32 to vector<8x32xf32>
    %5 = arith.addf %2, %4 : vector<8x32xf32>
    %c0_4 = arith.constant 0 : index
    %c0_5 = arith.constant 0 : index
    %6 = vector.load %arg4[%c0_4, %c0_5] : memref<8x32xf32, #tpu.memory_space<vmem>>, vector<8x32xf32>
    tpu.vector_store %arg4[%c0_4, %c0_5], %5 {strides = array<i32>} : memref<8x32xf32, #tpu.memory_space<vmem>>, vector<8x32xf32>,
    return
  }
  func.func @transform_0(%arg0: i32) -> i32 {
    %c0_i32 = arith.constant 0 : i32
    %c0_i32_0 = arith.constant 0 : i32
    return %c0_i32 : i32
  }
  func.func @transform_1(%arg0: i32) -> (i32, i32) {
    %c0_i32 = arith.constant 0 : i32
    %c0_i32_0 = arith.constant 0 : i32
    %c0_i32_1 = arith.constant 0 : i32
    return %c0_i32, %c0_i32_0 : i32, i32
  }
  func.func @transform_2(%arg0: i32) -> (i32, i32) {
    %c0_i32 = arith.constant 0 : i32
    %c0_i32_0 = arith.constant 0 : i32
    return %arg0, %c0_i32 : i32, i32
  }
  func.func @transform_3(%arg0: i32) -> (i32, i32) {
    %c0_i32 = arith.constant 0 : i32
    %c0_i32_0 = arith.constant 0 : i32
    return %arg0, %c0_i32 : i32, i32
  }
}

</mosaic_0001>

<llo_original>
// kernel: tpu_custom_call.1
$region0: #{tpu_custom_call.1}
  #allocation0 [shape = 'u32[]', space=smem, size = 0x4, offset = 0x4, fixed_abs, tag = 'smem constant byte address 0x4 - core index']
  #allocation1 [shape = 'u32[144,128]{1,0:T(1,128)}', space=vmem, size = 0x12000, scoped, tag = 'internal scratch']
  #allocation2 [shape = 'f32[1]{0:T(128)S(6)}', space=smem, size = 0x200, scoped, tag = 'scoped memory for tpu_custom_call.1']
  %s0 = inlined_call_operand.<no memory space> [shape: f32[1], index: 0, kind: input, shape index: {}]
  %s1 = inlined_call_operand.vmem [shape: f32[128,32], index: 1, kind: input, shape index: {}]
  %s2 = inlined_call_operand.vmem [shape: f32[8,128], index: 2, kind: input, shape index: {}]
  %s3 = inlined_call_operand.hbm [shape: f32[8,32], index: 3, kind: output, shape index: {}]
  %s4 = sld [smem:[#allocation0]]
  $region22: #{tpu_custom_call.1} parent=0
    _
  %s6 = ssub.s32 1, %s4
  %s7 = scalar_select 0, %s6, %s4
  %8 = sst [smem:[#allocation2]] %s0
  $region1: #{tpu_custom_call.1} parent=0
    #allocation3 [shape = 'u8[4096]{0}', space=vmem, size = 0x1000, scoped, tag = 'output window, operand 0, single buffered']
    #allocation4 [shape = 's32[1]{0}', space=sflag, size = 0x4, scoped, tag = 'scoped memory for tpu_custom_call.1']
    %9 = vsyncpa [#allocation4], 0
    // Predicated region
    $region2: #{tpu_custom_call.1} parent=1 // pred_check
      _
    $region3: #{tpu_custom_call.1} parent=1 // pred_check_branch
      %11 = sbr.rel (0) target = $region5
    $region4: #{tpu_custom_call.1} parent=1 // pred_region
      _
    $region5: #{tpu_custom_call.1} parent=1 // pred_fallthru
      _
    // Predicated region
    $region6: #{tpu_custom_call.1} parent=1 // pred_check
      _
    $region7: #{tpu_custom_call.1} parent=1 // pred_check_branch
      %13 = sbr.rel (0) target = $region9
    $region8: #{tpu_custom_call.1} parent=1 // pred_region
      _
    $region9: #{tpu_custom_call.1} parent=1 // pred_fallthru
      _
    // Predicated region
    $region10: #{tpu_custom_call.1} parent=1 // pred_check
      _
    $region11: #{tpu_custom_call.1} parent=1 // pred_check_branch
      %15 = sbr.rel (0) target = $region13
    $region12: #{tpu_custom_call.1} parent=1 // pred_region
      _
    $region13: #{tpu_custom_call.1} parent=1 // pred_fallthru
      _
    %v16 = vld [vmem:[%s2] sm:$0xff]
    %v17 = vld [vmem:[%s1] sm:$0xff]
    %v18 = vld [vmem:[%s1 + $0x8] sm:$0xff]
    %v19 = vld [vmem:[%s1 + $0x10] sm:$0xff]
    %v20 = vld [vmem:[%s1 + $0x18] sm:$0xff]
    %v21 = vld [vmem:[%s1 + $0x20] sm:$0xff]
    %v22 = vld [vmem:[%s1 + $0x28] sm:$0xff]
    %v23 = vld [vmem:[%s1 + $0x30] sm:$0xff]
    %v24 = vld [vmem:[%s1 + $0x38] sm:$0xff]
    %v25 = vld [vmem:[%s1 + $0x40] sm:$0xff]
    %v26 = vld [vmem:[%s1 + $0x48] sm:$0xff]
    %v27 = vld [vmem:[%s1 + $0x50] sm:$0xff]
    %v28 = vld [vmem:[%s1 + $0x58] sm:$0xff]
    %v29 = vld [vmem:[%s1 + $0x60] sm:$0xff]
    %v30 = vld [vmem:[%s1 + $0x68] sm:$0xff]
    %v31 = vld [vmem:[%s1 + $0x70] sm:$0xff]
    %v32 = vld [vmem:[%s1 + $0x78] sm:$0xff]
    %s33 = sld [smem:[#allocation2]]
    %v34 = vstv %s33
    %35 = vmatprep.subr.mxu0 0.0
    %36 = vmatpush1.msra.mxu0 %v17
    %37 = vmatprep.subr.mxu0 0.0
    %38 = vmatpush1.msra.mxu0 %v18
    %39 = vmatprep.subr.mxu0 0.0
    %40 = vmatpush1.msra.mxu0 %v19
    %41 = vmatprep.subr.mxu0 0.0
    %42 = vmatpush1.msra.mxu0 %v20
    %43 = vmatprep.subr.mxu0 0.0
    %44 = vmatpush1.msra.mxu0 %v21
    %45 = vmatprep.subr.mxu0 0.0
    %46 = vmatpush1.msra.mxu0 %v22
    %47 = vmatprep.subr.mxu0 0.0
    %48 = vmatpush1.msra.mxu0 %v23
    %49 = vmatprep.subr.mxu0 0.0
    %50 = vmatpush1.msra.mxu0 %v24
    %51 = vmatprep.subr.mxu0 0.0
    %52 = vmatpush1.msra.mxu0 %v25
    %53 = vmatprep.subr.mxu0 0.0
    %54 = vmatpush1.msra.mxu0 %v26
    %55 = vmatprep.subr.mxu0 0.0
    %56 = vmatpush1.msra.mxu0 %v27
    %57 = vmatprep.subr.mxu0 0.0
    %58 = vmatpush1.msra.mxu0 %v28
    %59 = vmatprep.subr.mxu0 0.0
    %60 = vmatpush1.msra.mxu0 %v29
    %61 = vmatprep.subr.mxu0 0.0
    %62 = vmatpush1.msra.mxu0 %v30
    %63 = vmatprep.subr.mxu0 0.0
    %64 = vmatpush1.msra.mxu0 %v31
    %65 = vmatprep.subr.mxu0 0.0
    %66 = vmatpush1.msra.mxu0 %v32
    %67 = vmatprep.subr.mxu0 0.0
    %68 = vmatpush1.msra.mxu0 0.0
    %69 = vmatprep.subr.mxu0 0.0
    %70 = vmatpush1.msra.mxu0 0.0
    %71 = vmatprep.subr.mxu0 0.0
    %72 = vmatpush1.msra.mxu0 0.0
    %73 = vmatprep.subr.mxu0 0.0
    %74 = vmatpush1.msra.mxu0 0.0
    %75 = vmatprep.subr.mxu0 0.0
    %76 = vmatpush1.msra.mxu0 0.0
    %77 = vmatprep.subr.mxu0 0.0
    %78 = vmatpush1.msra.mxu0 0.0
    %79 = vmatprep.subr.mxu0 0.0
    %80 = vmatpush1.msra.mxu0 0.0
    %81 = vmatprep.subr.mxu0 0.0
    %82 = vmatpush1.msra.mxu0 0.0
    %83 = vmatprep.subr.mxu0 0.0
    %84 = vmatpush1.msra.mxu0 0.0
    %85 = vmatprep.subr.mxu0 0.0
    %86 = vmatpush1.msra.mxu0 0.0
    %87 = vmatprep.subr.mxu0 0.0
    %88 = vmatpush1.msra.mxu0 0.0
    %89 = vmatprep.subr.mxu0 0.0
    %90 = vmatpush1.msra.mxu0 0.0
    %91 = vmatprep.subr.mxu0 0.0
    %92 = vmatpush1.msra.mxu0 0.0
    %93 = vmatprep.subr.mxu0 0.0
    %94 = vmatpush1.msra.mxu0 0.0
    %95 = vmatprep.subr.mxu0 0.0
    %96 = vmatpush1.msra.mxu0 0.0
    %97 = vmatprep.subr.mxu0 0.0
    %98 = vmatpush1.msra.mxu0 0.0
    %99 = vmatprep.mubr.f32.mxu0 0.0
    %100 = vmatmul.mubr.f32.gmra.mrb[0].mxu0 %v16
    %v101 = vpop.f32.mrb[0].mxu0
    %v102 = vadd.f32 %v34, %v101
    %v103 = vpop.f32.mrb[0].mxu0
    %104 = vdwg.mxu0
    %vm105 = vcmask 261120
    %106 = vst.msk [vmem:[#allocation3] sm:$0xff] %vm105, %v102
    // Predicated region
    $region14: #{tpu_custom_call.1} parent=1 // pred_check
      _
    $region15: #{tpu_custom_call.1} parent=1 // pred_check_branch
      %108 = sbr.rel (0) target = $region17
    $region16: #{tpu_custom_call.1} parent=1 // pred_region
      %s110 = ssub.s32 128, 128
      %111 = vsyncadd [#allocation4], %s110
      %s113 = sshll.u32 [#allocation3], 4
      %s114 = int_to_ptr.vmem [resolvable:$true] %s113
      %116 = dma.vmem_to_hbm [thread:$0]  %s114, 128, %s3, [#allocation4]
    $region17: #{tpu_custom_call.1} parent=1 // pred_fallthru
      _
    // Predicated region
    $region18: #{tpu_custom_call.1} parent=1 // pred_check
      _
    $region19: #{tpu_custom_call.1} parent=1 // pred_check_branch
      %118 = sbr.rel (0) target = $region21
    $region20: #{tpu_custom_call.1} parent=1 // pred_region
      %119 = dma.done [#allocation4], 128
    $region21: #{tpu_custom_call.1} parent=1 // pred_fallthru
      _
    %120 = vsyncpa [#allocation4], 1

</llo_original>
